<compile_context>
chip_gen: v5e
topology: v5e:2x2
jax: 0.10.0
libtpu: 0.0.40
codegen_flags: <defaults>
</compile_context>

<pallas_src>
import jax
import jax.numpy as jnp
from jax import lax
from jax.experimental import pallas as pl
from jax.experimental.pallas import tpu as pltpu


# Storage dtype for the streamed pre-gates (T,N,3H) and GRU outputs (T,N,H).
# bf16 halves their HBM round trip and VMEM double-buffers; the f32 carry in
# scratch keeps recurrence numerics intact (only pre-activation/output
# rounding is bf16).
PRE_STORE_DTYPE = jnp.bfloat16
Y_STORE_DTYPE = jnp.bfloat16


# ----------------------------------------------------------------------------
# Pallas kernel: one T-chunk of the GRU recurrence for one batch block.
#
# PyTorch GRU cell semantics (gate order r, z, n), with the input-side work
# and the r/z hidden biases pre-folded into `pre`:
#   hg  = h W_h^T                              (one fused (Nb,H)x(H,3H) matmul)
#   r_t = sigmoid(pre_r + hg_r)                pre_r includes b_ir + b_hr
#   z_t = sigmoid(pre_z + hg_z)                pre_z includes b_iz + b_hz
#   n_t = tanh  (pre_n + r_t * (hg_n + b_hn))  pre_n includes b_in only;
#                                              b_hn must stay inside r*(...)
#   h_t = n_t + z_t * (h_{t-1} - n_t)          == (1 - z)*n + z*h
# ----------------------------------------------------------------------------
def _gru_scan_kernel(pre_ref, w_h_ref, b_hn_ref, y_ref, h_ref):
    # pre_ref : (t_chunk, Nb, 3H)  streamed pre-gates (bf16 storage)
    # w_h_ref : (H, 3H)            [W_hr^T | W_hz^T | W_hn^T] (grid-invariant)
    # b_hn_ref: (1, H)  f32        hidden bias of the n gate
    # y_ref   : (t_chunk, Nb, H)   hidden-state outputs for this chunk
    # h_ref   : (Nb, H) f32        hidden-state carry (scratch, persists
    #                              across the t-chunk grid axis)
    t_chunk = y_ref.shape[0]
    H = h_ref.shape[-1]

    # Zero the carry at the first time chunk of every batch block.
    @pl.when(pl.program_id(1) == 0)
    def _():
        h_ref[...] = jnp.zeros_like(h_ref)

    def step(t, carry):
        h = h_ref[...]                                        # (Nb, H) f32
        # Single fused hidden-side matmul per time step (f32 accumulate).
        # TODO(synk): on real TPU with weight_dtype=bf16, keep a bf16 shadow
        # of h in a second scratch so the f32->bf16 cast leaves the serial
        # critical path.
        hg = jnp.dot(h.astype(w_h_ref.dtype), w_h_ref[...],
                     preferred_element_type=jnp.float32)      # (Nb, 3H)
        pre = pre_ref[t].astype(jnp.float32)                  # (Nb, 3H)

        r = jax.nn.sigmoid(pre[:, :H] + hg[:, :H])
        z = jax.nn.sigmoid(pre[:, H:2 * H] + hg[:, H:2 * H])
        n = jnp.tanh(pre[:, 2 * H:] + r * (hg[:, 2 * H:] + b_hn_ref[...]))

        h_new = n + z * (h - n)                               # (1-z)*n + z*h
        h_ref[...] = h_new
        y_ref[t] = h_new.astype(y_ref.dtype)
        return carry

    # Unroll only the short per-chunk loop: LLO scheduler visibility without
    # the vreg-spill / code-bloat risk of unrolling the full T.
    lax.fori_loop(0, t_chunk, step, 0, unroll=True)


def gru_recurrence_pallas(pre_tng, w_h, b_hn, *, out_dtype,
                          n_block=None, t_chunk=None,
                          vmem_limit_bytes=48 * 1024 * 1024):
    """Run the GRU recurrence on time-major pre-gates.

    pre_tng: (T, N, 3H), w_h: (H, 3H), b_hn: (1, H).  Returns (T, N, H).

    n_block: batch block size.  Default = N (single block).  Only split the
      batch across v7x's 2 TensorCores when Nb per core >= ~256 (MXU M tile);
      below that the per-step matmul is weight-reload bound and splitting
      merely doubles W_h DMA/VMEM.
    t_chunk: time-chunk size.  Chunking restores double-buffered DMA/compute
      overlap and keeps streamed blocks within v7x's 64 MiB VMEM.
    """
    T, N, G = pre_tng.shape
    H = w_h.shape[0]
    assert G == 3 * H
    # NOTE: for non-toy runs H should be a multiple of 128 (real VIBE H=2048
    # is) so the gate slices fall on lane boundaries; toy H=32 runs the
    # slower masked layout but stays correct.

    if n_block is None:
        n_block = N
    assert N % n_block == 0

    if t_chunk is None:
        t_chunk = min(T, 4)
    while T % t_chunk:            # pick a divisor of T
        t_chunk -= 1

    grid = (N // n_block, T // t_chunk)

    return pl.pallas_call(
        _gru_scan_kernel,
        out_shape=jax.ShapeDtypeStruct((T, N, H), out_dtype),
        grid=grid,
        in_specs=[
            # Streamed pre-gates: new (t_chunk, Nb, 3H) block per grid step.
            pl.BlockSpec((t_chunk, n_block, G), lambda i, t: (t, i, 0)),
            # Grid-invariant weight / bias blocks (constant index_map -> no
            # re-DMA across steps).
            # TODO(synk): single-buffer W_h (pipeline_mode=pl.Buffered(1)) to
            # reclaim its second VMEM buffer on v7x at H=2048.
            pl.BlockSpec((H, G), lambda i, t: (0, 0)),
            pl.BlockSpec((1, H), lambda i, t: (0, 0)),
        ],
        out_specs=pl.BlockSpec((t_chunk, n_block, H), lambda i, t: (t, i, 0)),
        scratch_shapes=[pltpu.VMEM((n_block, H), jnp.float32)],  # hidden carry
        compiler_params=pltpu.CompilerParams(
            # Batch blocks independent -> parallel; time chunks carry the
            # hidden state -> arbitrary (sequential).
            dimension_semantics=("parallel", "arbitrary"),
            # 48 MiB leaves headroom on v7x (64 MiB physical per TC) while
            # overriding the small default scoped limit on v5e/v6e.
            vmem_limit_bytes=vmem_limit_bytes,
        ),
    )(pre_tng, w_h, b_hn)


# ----------------------------------------------------------------------------
# One-time parameter packing (do NOT redo per forward call): transpose,
# concatenate gate weights, fold the r/z hidden biases into the pre-gate bias.
# ----------------------------------------------------------------------------
def prepare_params(params, weight_dtype=jnp.float32):
    """weight_dtype=jnp.bfloat16 is preferred on real TPU (bf16 MXU); the
    default stays f32 so the kernel also runs on backends without bf16 dot
    support and matches the f32 reference exactly on the weight path."""
    H = params["w_hr"].shape[0]
    w_i = jnp.concatenate(
        [params["w_ir"].T, params["w_iz"].T, params["w_in"].T], axis=1)  # (F,3H)
    w_h = jnp.concatenate(
        [params["w_hr"].T, params["w_hz"].T, params["w_hn"].T], axis=1)  # (H,3H)
    # Fold input biases + the r/z hidden biases into one pre-gate bias.
    # b_hn is NOT folded: PyTorch GRU applies it inside r * (W_hn h + b_hn).
    b_pre = jnp.concatenate([
        params["b_ir"] + params["b_hr"],
        params["b_iz"] + params["b_hz"],
        params["b_in"],
    ]).reshape(1, 3 * H)
    return {
        "w_i": w_i.astype(weight_dtype),
        "w_h": w_h.astype(weight_dtype),
        "b_pre": b_pre.astype(jnp.float32),
        "b_hn": params["b_hn"].reshape(1, H).astype(jnp.float32),
    }


def vibe_forward(x_ntf, prepped):
    """VIBE.forward hot path (TemporalEncoder).

    x_ntf: (batch, seqlen, F).  Returns the flattened temporal feature
    (batch*seqlen, H) that VIBE feeds to its SMPL Regressor.
    """
    n, t, f = x_ntf.shape
    w_i = prepped["w_i"]
    H = prepped["w_h"].shape[0]

    # Input-side GEMM hoisted out of the recurrence: one large matmul with
    # f32 accumulation; the n<->t permute is folded into the output layout
    # (time-major pre-gates).  Stored bf16 to halve the HBM round trip.
    pre = jnp.einsum("ntf,fg->tng", x_ntf.astype(w_i.dtype), w_i,
                     preferred_element_type=jnp.float32) + prepped["b_pre"]
    pre = pre.astype(PRE_STORE_DTYPE)

    y_tnh = gru_recurrence_pallas(pre, prepped["w_h"], prepped["b_hn"],
                                  out_dtype=Y_STORE_DTYPE)     # (T, N, H)

    y_nth = jnp.transpose(y_tnh, (1, 0, 2))                    # back to (N,T,H)
    if H == f:
        y_nth = y_nth.astype(x_ntf.dtype) + x_ntf              # use_residual=True
    feature = y_nth.astype(x_ntf.dtype).reshape(-1, H)         # reshape(-1, F)
    # TODO(synk): SMPL Regressor (decpose/decshape/deccam + SMPL mesh LBS,
    # projection to kp_2d/kp_3d) needs SMPL model data files and its class
    # definition is not provided; it is not implemented here.
    return feature


# ----------------------------------------------------------------------------
# Pure-JAX reference (lax.scan GRU, full f32) for a sanity check.
# ----------------------------------------------------------------------------
def temporal_encoder_ref(x_tnf, params):
    H = params["w_hr"].shape[0]
    N = x_tnf.shape[1]

    def step(h, x):
        r = jax.nn.sigmoid(x @ params["w_ir"].T + params["b_ir"]
                           + h @ params["w_hr"].T + params["b_hr"])
        z = jax.nn.sigmoid(x @ params["w_iz"].T + params["b_iz"]
                           + h @ params["w_hz"].T + params["b_hz"])
        n = jnp.tanh(x @ params["w_in"].T + params["b_in"]
                     + r * (h @ params["w_hn"].T + params["b_hn"]))
        h_new = (1.0 - z) * n + z * h
        return h_new, h_new + x

    h0 = jnp.zeros((N, H), jnp.float32)
    _, ys = lax.scan(step, h0, x_tnf)
    return ys


# ----------------------------------------------------------------------------
# Deterministic parameter init (shapes mirror nn.GRU(F, H) with n_layers=1).
# ----------------------------------------------------------------------------
def init_params(key, feature_size, hidden_size):
    F, H = feature_size, hidden_size
    ks = jax.random.split(key, 12)
    scale = 1.0 / jnp.sqrt(jnp.float32(H))
    u = lambda k, shape: jax.random.uniform(k, shape, jnp.float32, -scale, scale)
    names_shapes = [
        ("w_ir", (H, F)), ("w_iz", (H, F)), ("w_in", (H, F)),
        ("w_hr", (H, H)), ("w_hz", (H, H)), ("w_hn", (H, H)),
        ("b_ir", (H,)), ("b_iz", (H,)), ("b_in", (H,)),
        ("b_hr", (H,)), ("b_hz", (H,)), ("b_hn", (H,)),
    ]
    return {name: u(k, shape) for k, (name, shape) in zip(ks, names_shapes)}


if __name__ == "__main__":
    # Small shapes consistent with VIBE.forward: input (batch, seqlen, feat),
    # hidden_size == feature size so the residual branch is exercised.
    batch, seqlen, feat = 2, 8, 32
    hidden = feat

    key = jax.random.PRNGKey(0)
    k_x, k_p = jax.random.split(key)
    x = jax.random.normal(k_x, (batch, seqlen, feat), jnp.float32)
    params = init_params(k_p, feat, hidden)
    prepped = prepare_params(params)   # one-time weight packing / bias folding

    fwd = jax.jit(vibe_forward)
    feature = jax.block_until_ready(fwd(x, prepped))
    assert feature.shape == (batch * seqlen, feat)

    # Sanity check against the pure-JAX f32 reference GRU (bf16 storage of
    # pre/y introduces small numeric drift -> loosened tolerance).
    ref = temporal_encoder_ref(jnp.transpose(x, (1, 0, 2)), params)
    ref = jnp.transpose(ref, (1, 0, 2)).reshape(-1, feat)
    ref = jax.block_until_ready(ref)
    max_err = float(jnp.max(jnp.abs(feature - ref)))
    assert jnp.allclose(feature, ref, atol=5e-2, rtol=5e-2), max_err

    print("KERNEL_OK")
</pallas_src>

<mosaic_0001>
module attributes {stable_mosaic.version = 11 : i64} {
  func.func @_gru_scan_kernel(%arg0: i32, %arg1: i32, %arg2: memref<4x2x96xbf16, #tpu.memory_space<vmem>>, %arg3: memref<32x96xf32, #tpu.memory_space<vmem>>, %arg4: memref<1x32xf32, #tpu.memory_space<vmem>>, %arg5: memref<4x2x32xbf16, #tpu.memory_space<vmem>>, %arg6: memref<2x32xf32, #tpu.memory_space<vmem>>) attributes {dimension_semantics = [#tpu.dimension_semantics<parallel>, #tpu.dimension_semantics<arbitrary>], iteration_bounds = array<i64: 1, 2>, scalar_prefetch = 0 : i64, scratch_operands = 1 : i64, tpu.core_type = #tpu.core_type<tc>, window_params = [{transform_indices = @transform_0, window_bounds = array<i64: 4, 2, 96>}, {pipeline_mode = #tpu.pipeline_mode<synchronous>, transform_indices = @transform_1, window_bounds = array<i64: 32, 96>}, {pipeline_mode = #tpu.pipeline_mode<synchronous>, transform_indices = @transform_2, window_bounds = array<i64: 1, 32>}, {transform_indices = @transform_3, window_bounds = array<i64: 4, 2, 32>}]} {
    %c0_i32 = arith.constant 0 : i32
    %0 = arith.cmpi eq, %arg1, %c0_i32 : i32
    %1 = arith.extui %0 : i1 to i32
    %c0_i32_0 = arith.constant 0 : i32
    %2 = arith.cmpi ne, %1, %c0_i32_0 : i32
    scf.if %2 {
      %cst_60 = arith.constant 0.000000e+00 : f32
      %163 = vector.broadcast %cst_60 : f32 to vector<2x32xf32>
      %c0_61 = arith.constant 0 : index
      %c0_62 = arith.constant 0 : index
      %164 = vector.load %arg6[%c0_61, %c0_62] : memref<2x32xf32, #tpu.memory_space<vmem>>, vector<2x32xf32>
      tpu.vector_store %arg6[%c0_61, %c0_62], %163 {strides = array<i32>} : memref<2x32xf32, #tpu.memory_space<vmem>>, vector<2x32xf32>,
    } else {
    }
    %c0_i32_1 = arith.constant 0 : i32
    %c0 = arith.constant 0 : index
    %c0_2 = arith.constant 0 : index
    %3 = vector.load %arg6[%c0, %c0_2] : memref<2x32xf32, #tpu.memory_space<vmem>>, vector<2x32xf32>
    %c0_3 = arith.constant 0 : index
    %c0_4 = arith.constant 0 : index
    %4 = vector.load %arg3[%c0_3, %c0_4] : memref<32x96xf32, #tpu.memory_space<vmem>>, vector<32x96xf32>
    %cst = arith.constant dense<0.000000e+00> : vector<2x96xf32>
    %5 = tpu.matmul %3, %4, %cst {dimension_numbers = #tpu.dot_dimension_numbers<[1], [0], [0], [1], [0, 0, 1, 1], [], []>} : vector<2x32xf32>, vector<32x96xf32>, vector<2x96xf32> -> vector<2x96xf32>
    %6 = arith.index_cast %c0_i32_1 : i32 to index
    %c0_5 = arith.constant 0 : index
    %c0_6 = arith.constant 0 : index
    %7 = vector.load %arg2[%6, %c0_5, %c0_6] : memref<4x2x96xbf16, #tpu.memory_space<vmem>>, vector<1x2x96xbf16>
    %8 = vector.shape_cast %7 : vector<1x2x96xbf16> to vector<2x96xbf16>
    %9 = arith.extf %8 : vector<2x96xbf16> to vector<2x96xf32>
    %10 = vector.extract_strided_slice %9 {offsets = [0, 0], sizes = [2, 32], strides = [1, 1]} : vector<2x96xf32> to vector<2x32xf32>
    %11 = vector.extract_strided_slice %5 {offsets = [0, 0], sizes = [2, 32], strides = [1, 1]} : vector<2x96xf32> to vector<2x32xf32>
    %12 = arith.addf %10, %11 : vector<2x32xf32>
    %13 = arith.negf %12 : vector<2x32xf32>
    %14 = math.exp %13 : vector<2x32xf32>
    %cst_7 = arith.constant 1.000000e+00 : f32
    %15 = vector.broadcast %cst_7 : f32 to vector<2x32xf32>
    %16 = arith.addf %15, %14 : vector<2x32xf32>
    %17 = arith.divf %15, %16 : vector<2x32xf32>
    %18 = vector.extract_strided_slice %9 {offsets = [0, 32], sizes = [2, 32], strides = [1, 1]} : vector<2x96xf32> to vector<2x32xf32>
    %19 = vector.extract_strided_slice %5 {offsets = [0, 32], sizes = [2, 32], strides = [1, 1]} : vector<2x96xf32> to vector<2x32xf32>
    %20 = arith.addf %18, %19 : vector<2x32xf32>
    %21 = arith.negf %20 : vector<2x32xf32>
    %22 = math.exp %21 : vector<2x32xf32>
    %cst_8 = arith.constant 1.000000e+00 : f32
    %23 = vector.broadcast %cst_8 : f32 to vector<2x32xf32>
    %24 = arith.addf %23, %22 : vector<2x32xf32>
    %25 = arith.divf %23, %24 : vector<2x32xf32>
    %26 = vector.extract_strided_slice %9 {offsets = [0, 64], sizes = [2, 32], strides = [1, 1]} : vector<2x96xf32> to vector<2x32xf32>
    %27 = vector.extract_strided_slice %5 {offsets = [0, 64], sizes = [2, 32], strides = [1, 1]} : vector<2x96xf32> to vector<2x32xf32>
    %c0_9 = arith.constant 0 : index
    %c0_10 = arith.constant 0 : index
    %28 = vector.load %arg4[%c0_9, %c0_10] : memref<1x32xf32, #tpu.memory_space<vmem>>, vector<1x32xf32>
    %29 = vector.broadcast %28 : vector<1x32xf32> to vector<2x32xf32>
    %30 = arith.addf %27, %29 : vector<2x32xf32>
    %31 = arith.mulf %17, %30 : vector<2x32xf32>
    %32 = arith.addf %26, %31 : vector<2x32xf32>
    %33 = math.tanh %32 : vector<2x32xf32>
    %34 = arith.subf %3, %33 : vector<2x32xf32>
    %35 = arith.mulf %25, %34 : vector<2x32xf32>
    %36 = arith.addf %33, %35 : vector<2x32xf32>
    %c0_11 = arith.constant 0 : index
    %c0_12 = arith.constant 0 : index
    %37 = vector.load %arg6[%c0_11, %c0_12] : memref<2x32xf32, #tpu.memory_space<vmem>>, vector<2x32xf32>
    tpu.vector_store %arg6[%c0_11, %c0_12], %36 {strides = array<i32>} : memref<2x32xf32, #tpu.memory_space<vmem>>, vector<2x32xf32>,
    %38 = arith.truncf %36 : vector<2x32xf32> to vector<2x32xbf16>
    %39 = arith.index_cast %c0_i32_1 : i32 to index
    %c0_13 = arith.constant 0 : index
    %c0_14 = arith.constant 0 : index
    %40 = vector.load %arg5[%39, %c0_13, %c0_14] : memref<4x2x32xbf16, #tpu.memory_space<vmem>>, vector<1x2x32xbf16>
    %41 = vector.shape_cast %40 : vector<1x2x32xbf16> to vector<2x32xbf16>
    %42 = vector.shape_cast %38 : vector<2x32xbf16> to vector<1x2x32xbf16>
    tpu.vector_store %arg5[%39, %c0_13, %c0_14], %42 {strides = array<i32>} : memref<4x2x32xbf16, #tpu.memory_space<vmem>>, vector<1x2x32xbf16>,
    %c1_i32 = arith.constant 1 : i32
    %c0_15 = arith.constant 0 : index
    %c0_16 = arith.constant 0 : index
    %43 = vector.load %arg6[%c0_15, %c0_16] : memref<2x32xf32, #tpu.memory_space<vmem>>, vector<2x32xf32>
    %c0_17 = arith.constant 0 : index
    %c0_18 = arith.constant 0 : index
    %44 = vector.load %arg3[%c0_17, %c0_18] : memref<32x96xf32, #tpu.memory_space<vmem>>, vector<32x96xf32>
    %cst_19 = arith.constant dense<0.000000e+00> : vector<2x96xf32>
    %45 = tpu.matmul %43, %44, %cst_19 {dimension_numbers = #tpu.dot_dimension_numbers<[1], [0], [0], [1], [0, 0, 1, 1], [], []>} : vector<2x32xf32>, vector<32x96xf32>, vector<2x96xf32> -> vector<2x96xf32>
    %46 = arith.index_cast %c1_i32 : i32 to index
    %c0_20 = arith.constant 0 : index
    %c0_21 = arith.constant 0 : index
    %47 = vector.load %arg2[%46, %c0_20, %c0_21] : memref<4x2x96xbf16, #tpu.memory_space<vmem>>, vector<1x2x96xbf16>
    %48 = vector.shape_cast %47 : vector<1x2x96xbf16> to vector<2x96xbf16>
    %49 = arith.extf %48 : vector<2x96xbf16> to vector<2x96xf32>
    %50 = vector.extract_strided_slice %49 {offsets = [0, 0], sizes = [2, 32], strides = [1, 1]} : vector<2x96xf32> to vector<2x32xf32>
    %51 = vector.extract_strided_slice %45 {offsets = [0, 0], sizes = [2, 32], strides = [1, 1]} : vector<2x96xf32> to vector<2x32xf32>
    %52 = arith.addf %50, %51 : vector<2x32xf32>
    %53 = arith.negf %52 : vector<2x32xf32>
    %54 = math.exp %53 : vector<2x32xf32>
    %cst_22 = arith.constant 1.000000e+00 : f32
    %55 = vector.broadcast %cst_22 : f32 to vector<2x32xf32>
    %56 = arith.addf %55, %54 : vector<2x32xf32>
    %57 = arith.divf %55, %56 : vector<2x32xf32>
    %58 = vector.extract_strided_slice %49 {offsets = [0, 32], sizes = [2, 32], strides = [1, 1]} : vector<2x96xf32> to vector<2x32xf32>
    %59 = vector.extract_strided_slice %45 {offsets = [0, 32], sizes = [2, 32], strides = [1, 1]} : vector<2x96xf32> to vector<2x32xf32>
    %60 = arith.addf %58, %59 : vector<2x32xf32>
    %61 = arith.negf %60 : vector<2x32xf32>
    %62 = math.exp %61 : vector<2x32xf32>
    %cst_23 = arith.constant 1.000000e+00 : f32
    %63 = vector.broadcast %cst_23 : f32 to vector<2x32xf32>
    %64 = arith.addf %63, %62 : vector<2x32xf32>
    %65 = arith.divf %63, %64 : vector<2x32xf32>
    %66 = vector.extract_strided_slice %49 {offsets = [0, 64], sizes = [2, 32], strides = [1, 1]} : vector<2x96xf32> to vector<2x32xf32>
    %67 = vector.extract_strided_slice %45 {offsets = [0, 64], sizes = [2, 32], strides = [1, 1]} : vector<2x96xf32> to vector<2x32xf32>
    %c0_24 = arith.constant 0 : index
    %c0_25 = arith.constant 0 : index
    %68 = vector.load %arg4[%c0_24, %c0_25] : memref<1x32xf32, #tpu.memory_space<vmem>>, vector<1x32xf32>
    %69 = vector.broadcast %68 : vector<1x32xf32> to vector<2x32xf32>
    %70 = arith.addf %67, %69 : vector<2x32xf32>
    %71 = arith.mulf %57, %70 : vector<2x32xf32>
    %72 = arith.addf %66, %71 : vector<2x32xf32>
    %73 = math.tanh %72 : vector<2x32xf32>
    %74 = arith.subf %43, %73 : vector<2x32xf32>
    %75 = arith.mulf %65, %74 : vector<2x32xf32>
    %76 = arith.addf %73, %75 : vector<2x32xf32>
    %c0_26 = arith.constant 0 : index
    %c0_27 = arith.constant 0 : index
    %77 = vector.load %arg6[%c0_26, %c0_27] : memref<2x32xf32, #tpu.memory_space<vmem>>, vector<2x32xf32>
    tpu.vector_store %arg6[%c0_26, %c0_27], %76 {strides = array<i32>} : memref<2x32xf32, #tpu.memory_space<vmem>>, vector<2x32xf32>,
    %78 = arith.truncf %76 : vector<2x32xf32> to vector<2x32xbf16>
    %79 = arith.index_cast %c1_i32 : i32 to index
    %c0_28 = arith.constant 0 : index
    %c0_29 = arith.constant 0 : index
    %80 = vector.load %arg5[%79, %c0_28, %c0_29] : memref<4x2x32xbf16, #tpu.memory_space<vmem>>, vector<1x2x32xbf16>
    %81 = vector.shape_cast %80 : vector<1x2x32xbf16> to vector<2x32xbf16>
    %82 = vector.shape_cast %78 : vector<2x32xbf16> to vector<1x2x32xbf16>
    tpu.vector_store %arg5[%79, %c0_28, %c0_29], %82 {strides = array<i32>} : memref<4x2x32xbf16, #tpu.memory_space<vmem>>, vector<1x2x32xbf16>,
    %c2_i32 = arith.constant 2 : i32
    %c0_30 = arith.constant 0 : index
    %c0_31 = arith.constant 0 : index
    %83 = vector.load %arg6[%c0_30, %c0_31] : memref<2x32xf32, #tpu.memory_space<vmem>>, vector<2x32xf32>
    %c0_32 = arith.constant 0 : index
    %c0_33 = arith.constant 0 : index
    %84 = vector.load %arg3[%c0_32, %c0_33] : memref<32x96xf32, #tpu.memory_space<vmem>>, vector<32x96xf32>
    %cst_34 = arith.constant dense<0.000000e+00> : vector<2x96xf32>
    %85 = tpu.matmul %83, %84, %cst_34 {dimension_numbers = #tpu.dot_dimension_numbers<[1], [0], [0], [1], [0, 0, 1, 1], [], []>} : vector<2x32xf32>, vector<32x96xf32>, vector<2x96xf32> -> vector<2x96xf32>
    %86 = arith.index_cast %c2_i32 : i32 to index
    %c0_35 = arith.constant 0 : index
    %c0_36 = arith.constant 0 : index
    %87 = vector.load %arg2[%86, %c0_35, %c0_36] : memref<4x2x96xbf16, #tpu.memory_space<vmem>>, vector<1x2x96xbf16>
    %88 = vector.shape_cast %87 : vector<1x2x96xbf16> to vector<2x96xbf16>
    %89 = arith.extf %88 : vector<2x96xbf16> to vector<2x96xf32>
    %90 = vector.extract_strided_slice %89 {offsets = [0, 0], sizes = [2, 32], strides = [1, 1]} : vector<2x96xf32> to vector<2x32xf32>
    %91 = vector.extract_strided_slice %85 {offsets = [0, 0], sizes = [2, 32], strides = [1, 1]} : vector<2x96xf32> to vector<2x32xf32>
    %92 = arith.addf %90, %91 : vector<2x32xf32>
    %93 = arith.negf %92 : vector<2x32xf32>
    %94 = math.exp %93 : vector<2x32xf32>
    %cst_37 = arith.constant 1.000000e+00 : f32
    %95 = vector.broadcast %cst_37 : f32 to vector<2x32xf32>
    %96 = arith.addf %95, %94 : vector<2x32xf32>
    %97 = arith.divf %95, %96 : vector<2x32xf32>
    %98 = vector.extract_strided_slice %89 {offsets = [0, 32], sizes = [2, 32], strides = [1, 1]} : vector<2x96xf32> to vector<2x32xf32>
    %99 = vector.extract_strided_slice %85 {offsets = [0, 32], sizes = [2, 32], strides = [1, 1]} : vector<2x96xf32> to vector<2x32xf32>
    %100 = arith.addf %98, %99 : vector<2x32xf32>
    %101 = arith.negf %100 : vector<2x32xf32>
    %102 = math.exp %101 : vector<2x32xf32>
    %cst_38 = arith.constant 1.000000e+00 : f32
    %103 = vector.broadcast %cst_38 : f32 to vector<2x32xf32>
    %104 = arith.addf %103, %102 : vector<2x32xf32>
    %105 = arith.divf %103, %104 : vector<2x32xf32>
    %106 = vector.extract_strided_slice %89 {offsets = [0, 64], sizes = [2, 32], strides = [1, 1]} : vector<2x96xf32> to vector<2x32xf32>
    %107 = vector.extract_strided_slice %85 {offsets = [0, 64], sizes = [2, 32], strides = [1, 1]} : vector<2x96xf32> to vector<2x32xf32>
    %c0_39 = arith.constant 0 : index
    %c0_40 = arith.constant 0 : index
    %108 = vector.load %arg4[%c0_39, %c0_40] : memref<1x32xf32, #tpu.memory_space<vmem>>, vector<1x32xf32>
    %109 = vector.broadcast %108 : vector<1x32xf32> to vector<2x32xf32>
    %110 = arith.addf %107, %109 : vector<2x32xf32>
    %111 = arith.mulf %97, %110 : vector<2x32xf32>
    %112 = arith.addf %106, %111 : vector<2x32xf32>
    %113 = math.tanh %112 : vector<2x32xf32>
    %114 = arith.subf %83, %113 : vector<2x32xf32>
    %115 = arith.mulf %105, %114 : vector<2x32xf32>
    %116 = arith.addf %113, %115 : vector<2x32xf32>
    %c0_41 = arith.constant 0 : index
    %c0_42 = arith.constant 0 : index
    %117 = vector.load %arg6[%c0_41, %c0_42] : memref<2x32xf32, #tpu.memory_space<vmem>>, vector<2x32xf32>
    tpu.vector_store %arg6[%c0_41, %c0_42], %116 {strides = array<i32>} : memref<2x32xf32, #tpu.memory_space<vmem>>, vector<2x32xf32>,
    %118 = arith.truncf %116 : vector<2x32xf32> to vector<2x32xbf16>
    %119 = arith.index_cast %c2_i32 : i32 to index
    %c0_43 = arith.constant 0 : index
    %c0_44 = arith.constant 0 : index
    %120 = vector.load %arg5[%119, %c0_43, %c0_44] : memref<4x2x32xbf16, #tpu.memory_space<vmem>>, vector<1x2x32xbf16>
    %121 = vector.shape_cast %120 : vector<1x2x32xbf16> to vector<2x32xbf16>
    %122 = vector.shape_cast %118 : vector<2x32xbf16> to vector<1x2x32xbf16>
    tpu.vector_store %arg5[%119, %c0_43, %c0_44], %122 {strides = array<i32>} : memref<4x2x32xbf16, #tpu.memory_space<vmem>>, vector<1x2x32xbf16>,
    %c3_i32 = arith.constant 3 : i32
    %c0_45 = arith.constant 0 : index
    %c0_46 = arith.constant 0 : index
    %123 = vector.load %arg6[%c0_45, %c0_46] : memref<2x32xf32, #tpu.memory_space<vmem>>, vector<2x32xf32>
    %c0_47 = arith.constant 0 : index
    %c0_48 = arith.constant 0 : index
    %124 = vector.load %arg3[%c0_47, %c0_48] : memref<32x96xf32, #tpu.memory_space<vmem>>, vector<32x96xf32>
    %cst_49 = arith.constant dense<0.000000e+00> : vector<2x96xf32>
    %125 = tpu.matmul %123, %124, %cst_49 {dimension_numbers = #tpu.dot_dimension_numbers<[1], [0], [0], [1], [0, 0, 1, 1], [], []>} : vector<2x32xf32>, vector<32x96xf32>, vector<2x96xf32> -> vector<2x96xf32>
    %126 = arith.index_cast %c3_i32 : i32 to index
    %c0_50 = arith.constant 0 : index
    %c0_51 = arith.constant 0 : index
    %127 = vector.load %arg2[%126, %c0_50, %c0_51] : memref<4x2x96xbf16, #tpu.memory_space<vmem>>, vector<1x2x96xbf16>
    %128 = vector.shape_cast %127 : vector<1x2x96xbf16> to vector<2x96xbf16>
    %129 = arith.extf %128 : vector<2x96xbf16> to vector<2x96xf32>
    %130 = vector.extract_strided_slice %129 {offsets = [0, 0], sizes = [2, 32], strides = [1, 1]} : vector<2x96xf32> to vector<2x32xf32>
    %131 = vector.extract_strided_slice %125 {offsets = [0, 0], sizes = [2, 32], strides = [1, 1]} : vector<2x96xf32> to vector<2x32xf32>
    %132 = arith.addf %130, %131 : vector<2x32xf32>
    %133 = arith.negf %132 : vector<2x32xf32>
    %134 = math.exp %133 : vector<2x32xf32>
    %cst_52 = arith.constant 1.000000e+00 : f32
    %135 = vector.broadcast %cst_52 : f32 to vector<2x32xf32>
    %136 = arith.addf %135, %134 : vector<2x32xf32>
    %137 = arith.divf %135, %136 : vector<2x32xf32>
    %138 = vector.extract_strided_slice %129 {offsets = [0, 32], sizes = [2, 32], strides = [1, 1]} : vector<2x96xf32> to vector<2x32xf32>
    %139 = vector.extract_strided_slice %125 {offsets = [0, 32], sizes = [2, 32], strides = [1, 1]} : vector<2x96xf32> to vector<2x32xf32>
    %140 = arith.addf %138, %139 : vector<2x32xf32>
    %141 = arith.negf %140 : vector<2x32xf32>
    %142 = math.exp %141 : vector<2x32xf32>
    %cst_53 = arith.constant 1.000000e+00 : f32
    %143 = vector.broadcast %cst_53 : f32 to vector<2x32xf32>
    %144 = arith.addf %143, %142 : vector<2x32xf32>
    %145 = arith.divf %143, %144 : vector<2x32xf32>
    %146 = vector.extract_strided_slice %129 {offsets = [0, 64], sizes = [2, 32], strides = [1, 1]} : vector<2x96xf32> to vector<2x32xf32>
    %147 = vector.extract_strided_slice %125 {offsets = [0, 64], sizes = [2, 32], strides = [1, 1]} : vector<2x96xf32> to vector<2x32xf32>
    %c0_54 = arith.constant 0 : index
    %c0_55 = arith.constant 0 : index
    %148 = vector.load %arg4[%c0_54, %c0_55] : memref<1x32xf32, #tpu.memory_space<vmem>>, vector<1x32xf32>
    %149 = vector.broadcast %148 : vector<1x32xf32> to vector<2x32xf32>
    %150 = arith.addf %147, %149 : vector<2x32xf32>
    %151 = arith.mulf %137, %150 : vector<2x32xf32>
    %152 = arith.addf %146, %151 : vector<2x32xf32>
    %153 = math.tanh %152 : vector<2x32xf32>
    %154 = arith.subf %123, %153 : vector<2x32xf32>
    %155 = arith.mulf %145, %154 : vector<2x32xf32>
    %156 = arith.addf %153, %155 : vector<2x32xf32>
    %c0_56 = arith.constant 0 : index
    %c0_57 = arith.constant 0 : index
    %157 = vector.load %arg6[%c0_56, %c0_57] : memref<2x32xf32, #tpu.memory_space<vmem>>, vector<2x32xf32>
    tpu.vector_store %arg6[%c0_56, %c0_57], %156 {strides = array<i32>} : memref<2x32xf32, #tpu.memory_space<vmem>>, vector<2x32xf32>,
    %158 = arith.truncf %156 : vector<2x32xf32> to vector<2x32xbf16>
    %159 = arith.index_cast %c3_i32 : i32 to index
    %c0_58 = arith.constant 0 : index
    %c0_59 = arith.constant 0 : index
    %160 = vector.load %arg5[%159, %c0_58, %c0_59] : memref<4x2x32xbf16, #tpu.memory_space<vmem>>, vector<1x2x32xbf16>
    %161 = vector.shape_cast %160 : vector<1x2x32xbf16> to vector<2x32xbf16>
    %162 = vector.shape_cast %158 : vector<2x32xbf16> to vector<1x2x32xbf16>
    tpu.vector_store %arg5[%159, %c0_58, %c0_59], %162 {strides = array<i32>} : memref<4x2x32xbf16, #tpu.memory_space<vmem>>, vector<1x2x32xbf16>,
    %c4_i32 = arith.constant 4 : i32
    return
  }
  func.func @transform_0(%arg0: i32, %arg1: i32) -> (i32, i32, i32) {
    %c0_i32 = arith.constant 0 : i32
    %c0_i32_0 = arith.constant 0 : i32
    return %arg1, %arg0, %c0_i32 : i32, i32, i32
  }
  func.func @transform_1(%arg0: i32, %arg1: i32) -> (i32, i32) {
    %c0_i32 = arith.constant 0 : i32
    %c0_i32_0 = arith.constant 0 : i32
    %c0_i32_1 = arith.constant 0 : i32
    return %c0_i32, %c0_i32_0 : i32, i32
  }
  func.func @transform_2(%arg0: i32, %arg1: i32) -> (i32, i32) {
    %c0_i32 = arith.constant 0 : i32
    %c0_i32_0 = arith.constant 0 : i32
    %c0_i32_1 = arith.constant 0 : i32
    return %c0_i32, %c0_i32_0 : i32, i32
  }
  func.func @transform_3(%arg0: i32, %arg1: i32) -> (i32, i32, i32) {
    %c0_i32 = arith.constant 0 : i32
    %c0_i32_0 = arith.constant 0 : i32
    return %arg1, %arg0, %c0_i32 : i32, i32, i32
  }
}

</mosaic_0001>

<llo_original>
// kernel: vibe_forward.1
$region0: #{vibe_forward.1}
  #allocation0 [shape = 'u32[]', space=smem, size = 0x4, offset = 0x4, fixed_abs, tag = 'smem constant byte address 0x4 - core index']
  #allocation1 [shape = 'u32[72,128]{1,0:T(1,128)}', space=vmem, size = 0x9000, scoped, tag = 'internal scratch']
  #allocation2 [shape = 'f32[2,32]{1,0:T(2,128)}', space=vmem, size = 0x400, scoped, tag = 'scratch operand']
  %s0 = inlined_call_operand.vmem [shape: bf16[8,2,96], index: 0, kind: input, shape index: {}]
  %s1 = inlined_call_operand.vmem [shape: f32[32,96], index: 1, kind: input, shape index: {}]
  %s2 = inlined_call_operand.vmem [shape: f32[1,32], index: 2, kind: input, shape index: {}]
  %s3 = inlined_call_operand.vmem [shape: bf16[8,2,32], index: 3, kind: output, shape index: {}]
  %s4 = sld [smem:[#allocation0]]
  $region49: #{vibe_forward.1} parent=0
    _
  %s6 = ssub.s32 1, %s4
  %s7 = scalar_select 0, %s6, %s4
  loop: start=0, step=1, limit=4
  $region2: #{vibe_forward.1} parent=0 // loop_pre_header
    _
  $region3: #{vibe_forward.1} parent=0 // loop_header
    %s9 = sphi 0, %s13
    %p10 = scmp.ge.s32.totalorder %s9, 4
    %s16 = sphi 0, %s28
    %s17 = sphi 0, %s24
    %s18 = sphi 0, %s16
    %s19 = sphi 0, %s17
    %s20 = sphi 0, %s18
    %s21 = sphi 0, %s19
    %s33 = sphi 0, %s35
    %s36 = sphi 0, %s33
    %s37 = sphi 0, %s36
    %s53 = sphi 0, %s37
    %s57 = sphi 0, %s57
    %s59 = sphi 0, %s57
    %s60 = sphi 0, %s59
    %s74 = sphi 0, %s60
    %s78 = sphi 0, %s78
    %s80 = sphi 0, %s78
    %s81 = sphi 0, %s80
    %s95 = sphi 0, %s81
    %s103 = sphi 0, %s105
    %s106 = sphi 0, %s103
    %s107 = sphi 0, %s106
    %s123 = sphi 0, %s107
  $region4: #{vibe_forward.1} parent=0 // loop_header_branch
    %12 = sbr.rel (%p10) target = $region8
  $region5: #{vibe_forward.1} parent=0 // loop_body
    %s14 = ssub.s32 %s9, 1
    %s15 = ssub.s32 %s9, 2
    %s22 = sadd.s32 1, %s17
    %p23 = scmp.ge.s32.totalorder %s22, 2
    %s24 = scalar_select %p23, 0, %s22
    %s25 = sadd.s32 1, %s16
    %s26 = scalar_select %p23, %s25, %s16
    %p27 = scmp.ge.s32.totalorder %s26, 1
    %s28 = scalar_select %p27, 0, %s26
    %s29 = ssub.s32 %s17, %s24
    %s30 = ssub.s32 %s16, %s28
    %s31 = sor.u32 %s29, %s30
    %p32 = scmp.eq.s32.totalorder %s31, 0
    %s34 = sadd.s32 %s33, 1
    %s35 = scalar_select %p32, %s33, %s34
    %p38 = pneg %p32
    %p39 = scmp.eq.s32.totalorder %s9, 1
    %p40 = por %p38, %p39
    %p41 = scmp.ne.s32.totalorder %s33, %s36
    %p42 = scmp.eq.s32.totalorder %s9, 0
    %p43 = por %p41, %p42
    %p44 = scmp.ne.s32.totalorder %s33, %s36
    %p45 = scmp.eq.s32.totalorder %s14, 1
    %p46 = por %p44, %p45
    %p47 = scmp.ne.s32.totalorder %s36, %s37
    %p48 = scmp.eq.s32.totalorder %s14, 0
    %p49 = por %p47, %p48
    %p50 = scmp.ne.s32.totalorder %s36, %s37
    %p51 = scmp.eq.s32.totalorder %s15, 1
    %p52 = por %p50, %p51
    %p54 = scmp.ne.s32.totalorder %s37, %s53
    %p55 = scmp.eq.s32.totalorder %s15, 0
    %p56 = por %p54, %p55
    %s58 = sadd.s32 %s57, 1
    %p61 = scmp.eq.s32.totalorder %s9, 1
    %p62 = scmp.ne.s32.totalorder %s57, %s59
    %p63 = scmp.eq.s32.totalorder %s9, 0
    %p64 = por %p62, %p63
    %p65 = scmp.ne.s32.totalorder %s57, %s59
    %p66 = scmp.eq.s32.totalorder %s14, 1
    %p67 = por %p65, %p66
    %p68 = scmp.ne.s32.totalorder %s59, %s60
    %p69 = scmp.eq.s32.totalorder %s14, 0
    %p70 = por %p68, %p69
    %p71 = scmp.ne.s32.totalorder %s59, %s60
    %p72 = scmp.eq.s32.totalorder %s15, 1
    %p73 = por %p71, %p72
    %p75 = scmp.ne.s32.totalorder %s60, %s74
    %p76 = scmp.eq.s32.totalorder %s15, 0
    %p77 = por %p75, %p76
    %s79 = sadd.s32 %s78, 1
    %p82 = scmp.eq.s32.totalorder %s9, 1
    %p83 = scmp.ne.s32.totalorder %s78, %s80
    %p84 = scmp.eq.s32.totalorder %s9, 0
    %p85 = por %p83, %p84
    %p86 = scmp.ne.s32.totalorder %s78, %s80
    %p87 = scmp.eq.s32.totalorder %s14, 1
    %p88 = por %p86, %p87
    %p89 = scmp.ne.s32.totalorder %s80, %s81
    %p90 = scmp.eq.s32.totalorder %s14, 0
    %p91 = por %p89, %p90
    %p92 = scmp.ne.s32.totalorder %s80, %s81
    %p93 = scmp.eq.s32.totalorder %s15, 1
    %p94 = por %p92, %p93
    %p96 = scmp.ne.s32.totalorder %s81, %s95
    %p97 = scmp.eq.s32.totalorder %s15, 0
    %p98 = por %p96, %p97
    %s99 = ssub.s32 %s17, %s24
    %s100 = ssub.s32 %s16, %s28
    %s101 = sor.u32 %s99, %s100
    %p102 = scmp.eq.s32.totalorder %s101, 0
    %s104 = sadd.s32 %s103, 1
    %s105 = scalar_select %p102, %s103, %s104
    %p108 = pneg %p102
    %p109 = scmp.eq.s32.totalorder %s9, 1
    %p110 = por %p108, %p109
    %p111 = scmp.ne.s32.totalorder %s103, %s106
    %p112 = scmp.eq.s32.totalorder %s9, 0
    %p113 = por %p111, %p112
    %p114 = scmp.ne.s32.totalorder %s103, %s106
    %p115 = scmp.eq.s32.totalorder %s14, 1
    %p116 = por %p114, %p115
    %p117 = scmp.ne.s32.totalorder %s106, %s107
    %p118 = scmp.eq.s32.totalorder %s14, 0
    %p119 = por %p117, %p118
    %p120 = scmp.ne.s32.totalorder %s106, %s107
    %p121 = scmp.eq.s32.totalorder %s15, 1
    %p122 = por %p120, %p121
    %p124 = scmp.ne.s32.totalorder %s107, %s123
    %p125 = scmp.eq.s32.totalorder %s15, 0
    %p126 = por %p124, %p125
    %p127 = scmp.le.s32.totalorder 1, %s9
    %p128 = scmp.lt.s32.totalorder %s9, 3
    %p129 = pnand %p127, %p128
    %p130 = pneg %p129
    // Predicated region
    $region9: #{vibe_forward.1} parent=5 // pred_check
      _
    $region10: #{vibe_forward.1} parent=5 // pred_check_branch
      %132 = sbr.rel (%p129) target = $region12
    $region11: #{vibe_forward.1} parent=5 // pred_region
      %s133 = ssub.s32 %s9, 1
      // Predicated region
      $region13: #{vibe_forward.1} parent=11 // pred_check
        %p134 = pneg %p70
      $region14: #{vibe_forward.1} parent=11 // pred_check_branch
        %136 = sbr.rel (%p134) target = $region16
      $region15: #{vibe_forward.1} parent=11 // pred_region
        _
      $region16: #{vibe_forward.1} parent=11 // pred_fallthru
        _
      // Predicated region
      $region17: #{vibe_forward.1} parent=11 // pred_check
        %p137 = pneg %p91
      $region18: #{vibe_forward.1} parent=11 // pred_check_branch
        %139 = sbr.rel (%p137) target = $region20
      $region19: #{vibe_forward.1} parent=11 // pred_region
        _
      $region20: #{vibe_forward.1} parent=11 // pred_fallthru
        _
    $region12: #{vibe_forward.1} parent=5 // pred_fallthru
      _
    %p140 = scmp.lt.s32.totalorder %s9, 2
    // Predicated region
    $region21: #{vibe_forward.1} parent=5 // pred_check
      %p141 = pneg %p140
    $region22: #{vibe_forward.1} parent=5 // pred_check_branch
      %143 = sbr.rel (%p141) target = $region24
    $region23: #{vibe_forward.1} parent=5 // pred_region
      // Predicated region
      $region25: #{vibe_forward.1} parent=23 // pred_check
        %p144 = pneg %p43
      $region26: #{vibe_forward.1} parent=23 // pred_check_branch
        %146 = sbr.rel (%p144) target = $region28
      $region27: #{vibe_forward.1} parent=23 // pred_region
        %s147 = smul.u32 4, %s17
        %p148 = scmp.lt.s32.totalorder %s147, 7
        %s149 = scalar_select %p148, %s147, 7
        %p150 = scmp.lt.s32.totalorder %s16, 0
        %s151 = scalar_select %p150, %s16, 0
        %s152 = sadd.s32 %s151, %s149
        %s153 = scalar_lea.vmem %s0, %s152
        %s154 = smul.u32 4, %s17
      $region28: #{vibe_forward.1} parent=23 // pred_fallthru
        _
    $region24: #{vibe_forward.1} parent=5 // pred_fallthru
      _
    %p155 = scmp.le.s32.totalorder 1, %s9
    %p156 = scmp.lt.s32.totalorder %s9, 3
    %p157 = pnand %p155, %p156
    %p158 = pneg %p157
    // Predicated region
    $region29: #{vibe_forward.1} parent=5 // pred_check
      _
    $region30: #{vibe_forward.1} parent=5 // pred_check_branch
      %160 = sbr.rel (%p157) target = $region32
    $region31: #{vibe_forward.1} parent=5 // pred_region
      %s161 = ssub.s32 %s9, 1
      %s162 = smul.u32 4, %s19
      %p163 = scmp.lt.s32.totalorder %s162, 7
      %s164 = scalar_select %p163, %s162, 7
      %p165 = scmp.lt.s32.totalorder %s18, 0
      %s166 = scalar_select %p165, %s18, 0
      %s167 = sadd.s32 %s166, %s164
      %s168 = scalar_lea.vmem %s0, %s167
      %p169 = pneg %p49
      %p170 = pneg %p46
      %p171 = pneg %p70
      %p172 = pneg %p67
      %p173 = pneg %p91
      %p174 = pneg %p88
      %p175 = pneg %p119
      %p176 = pneg %p116
      %s177 = smul.u32 4, %s19
      %p178 = scmp.lt.s32.totalorder %s177, 7
      %s179 = scalar_select %p178, %s177, 7
      %p180 = scmp.lt.s32.totalorder %s18, 0
      %s181 = scalar_select %p180, %s18, 0
      %s182 = sadd.s32 %s181, %s179
      %s183 = scalar_lea.vmem %s3, %s182
      %s184 = smul.u32 4, %s19
      %p185 = scmp.lt.s32.totalorder %s184, 7
      %s186 = scalar_select %p185, %s184, 7
      %p187 = scmp.lt.s32.totalorder %s18, 0
      %s188 = scalar_select %p187, %s18, 0
      %s189 = sadd.s32 %s188, %s186
      %s190 = scalar_lea.vmem %s0, %s189
      %s191 = smul.u32 4, %s19
      %s192 = smul.u32 4, %s19
      %p193 = scmp.lt.s32.totalorder %s192, 7
      %s194 = scalar_select %p193, %s192, 7
      %p195 = scmp.lt.s32.totalorder %s18, 0
      %s196 = scalar_select %p195, %s18, 0
      %s197 = sadd.s32 %s196, %s194
      %s198 = scalar_lea.vmem %s3, %s197
      %s199 = smul.u32 4, %s19
      %p200 = scmp.eq.s32.totalorder %s19, 0
      // Predicated region
      $region33: #{vibe_forward.1} parent=31 // pred_check
        %p201 = pneg %p200
      $region34: #{vibe_forward.1} parent=31 // pred_check_branch
        %203 = sbr.rel (%p201) target = $region36
      $region35: #{vibe_forward.1} parent=31 // pred_region
        %vm204 = vcmask 254976
        %205 = vst.msk [vmem:[#allocation2] sm:$0x3] %vm204, 0.0
      $region36: #{vibe_forward.1} parent=31 // pred_fallthru
        _
      %v206 = vld [vmem:[#allocation2] sm:$0x3]
      %v207 = vld [vmem:[%s1] sm:$0xff]
      %v208 = vld [vmem:[%s1 + $0x8] sm:$0xff]
      %v209 = vld [vmem:[%s1 + $0x10] sm:$0xff]
      %v210 = vld [vmem:[%s1 + $0x18] sm:$0xff]
      %vm211 = vcmask 261120
      %v213 = vsel %vm211, %v206, 0
      %215 = vmatpush.msra.mxu0 0.0
      %216 = vmatpush.msra.mxu0 0.0
      %217 = vmatpush.msra.mxu0 0.0
      %218 = vmatpush.msra.mxu0 0.0
      %219 = vmatpush.msra.mxu0 0.0
      %220 = vmatpush.msra.mxu0 0.0
      %221 = vmatpush.msra.mxu0 0.0
      %222 = vmatpush.msra.mxu0 0.0
      %223 = vmatpush.msra.mxu0 0.0
      %224 = vmatpush.msra.mxu0 0.0
      %225 = vmatpush.msra.mxu0 0.0
      %226 = vmatpush.msra.mxu0 0.0
      %227 = vmatpush.msra.mxu0 %v210
      %228 = vmatpush.msra.mxu0 %v209
      %229 = vmatpush.msra.mxu0 %v208
      %230 = vmatpush.msra.mxu0 %v207
      %231 = vmatmul.f32.gmra.mxu0 %v213
      %v232 = vpop.f32.mrf.mxu0
      %v233 = vadd.f32 0.0, %v232
      %234 = vdwg.mxu0
      %v235 = vld [vmem:[%s190] sm:$0x1]
      %v236 = vunpack.c.l.bf16 %v235
      %v237 = vadd.f32 %v236, %v233
      %v238 = vxor.u32 %v237, 2147483648
      %v239 = vmul.f32 %v238, 1.442695
      %v240 = vpow.pop %v239
      %v241 = vadd.f32 %v240, 1.0
      %v242 = vrcp.pop %v241
      %v243 = vmul.f32 %v241, %v242
      %v244 = vsub.f32 1.0, %v243
      %v245 = vmul.f32 %v242, %v244
      %v246 = vadd.f32 %v242, %v245
      %vm247 = vweird.f32 %v241
      %vm248 = vweird.f32 %v242
      %vm249 = vmor %vm247, %vm248
      %v250 = vsel %vm249, %v242, %v246
      %v251 = vand.u32 2147483647, %v241
      %vm252 = vcmp.eq.f32.partialorder %v251, 8.507059e+37
      %v253 = vand.u32 %v241, 2147483648
      %v254 = vor.u32 1.1754944e-38, %v253
      %v255 = vsel %vm252, %v254, %v250
      %v256 = vmul.f32 1.0, %v255
      %v257 = vld [vmem:[%s2] sm:$0x1]
      %v259 = vperm.slane %v257, 0
      %260 = vrot.lane.b32.xlu0 %v259, 64
      %v261 = vpop.permute.xlu0 %260
      %v263 = vadd.f32 %v233, %v261
      %265 = vrot.lane.b32.xlu0 %v263, 64
      %v266 = vpop.permute.xlu0 %265
      %v268 = vmul.f32 %v256, %v266
      %270 = vrot.lane.b32.xlu0 %v268, 64
      %v271 = vpop.permute.xlu0 %270
      %v273 = vadd.f32 %v236, %v271
      %v274 = vtanh.pop %v273
      %276 = vst [vmem:[#allocation1] ss:$4 sm:$0xff] %v274
      %v277 = vld.sshfl [vmem:[#allocation1] sm:$0xff pattern:$0x73625140]
      %278 = vrot.lane.b32.xlu0 %v277, 64
      %v279 = vpop.permute.xlu0 %278
      %v281 = vsub.f32 %v206, %v279
      %283 = vrot.lane.b32.xlu0 %v281, 32
      %v284 = vpop.permute.xlu0 %283
      %v286 = vmul.f32 %v256, %v284
      %288 = vrot.lane.b32.xlu0 %v286, 32
      %v289 = vpop.permute.xlu0 %288
      %v291 = vadd.f32 %v274, %v289
      %293 = vst [vmem:[#allocation1] ss:$4 sm:$0xff] %v291
      %v294 = vld.sshfl [vmem:[#allocation1] sm:$0xff pattern:$0x73625140]
      %295 = vrot.lane.b32.xlu0 %v294, 64
      %v296 = vpop.permute.xlu0 %295
      %vm298 = vcmask 254976
      %299 = vst.msk [vmem:[#allocation2] sm:$0x3] %vm298, %v296
      %v300 = vpack.c.bf16 %v291, %v291
      %v302 = vrot.slane %v300, 3
      %vm303 = vcmask 1040384
      %v306 = vsel %vm303, %v300, %v302
      %308 = vrot.lane.b32.xlu0 %v306, 64
      %v309 = vpop.permute.xlu0 %308
      %vm311 = vcmask 253952
      %312 = vst.msk [vmem:[%s198] sm:$0x1] %vm311, %v309
      %v313 = vld [vmem:[#allocation2] sm:$0x3]
      %v314 = vld [vmem:[%s1] sm:$0xff]
      %v315 = vld [vmem:[%s1 + $0x8] sm:$0xff]
      %v316 = vld [vmem:[%s1 + $0x10] sm:$0xff]
      %v317 = vld [vmem:[%s1 + $0x18] sm:$0xff]
      %v319 = vsel %vm211, %v313, 0
      %321 = vmatpush.msra.mxu0 0.0
      %322 = vmatpush.msra.mxu0 0.0
      %323 = vmatpush.msra.mxu0 0.0
      %324 = vmatpush.msra.mxu0 0.0
      %325 = vmatpush.msra.mxu0 0.0
      %326 = vmatpush.msra.mxu0 0.0
      %327 = vmatpush.msra.mxu0 0.0
      %328 = vmatpush.msra.mxu0 0.0
      %329 = vmatpush.msra.mxu0 0.0
      %330 = vmatpush.msra.mxu0 0.0
      %331 = vmatpush.msra.mxu0 0.0
      %332 = vmatpush.msra.mxu0 0.0
      %333 = vmatpush.msra.mxu0 %v317
      %334 = vmatpush.msra.mxu0 %v316
      %335 = vmatpush.msra.mxu0 %v315
      %336 = vmatpush.msra.mxu0 %v314
      %337 = vmatmul.f32.gmra.mxu0 %v319
      %v338 = vpop.f32.mrf.mxu0
      %v339 = vadd.f32 0.0, %v338
      %340 = vdwg.mxu0
      %s341 = scalar_lea.vmem %s190, 1
      %v342 = vld [vmem:[%s341] sm:$0x1]
      %v343 = vunpack.c.l.bf16 %v342
      %v344 = vadd.f32 %v343, %v339
      %v345 = vxor.u32 %v344, 2147483648
      %v346 = vmul.f32 %v345, 1.442695
      %v347 = vpow.pop %v346
      %v348 = vadd.f32 %v347, 1.0
      %v349 = vrcp.pop %v348
      %v350 = vmul.f32 %v348, %v349
      %v351 = vsub.f32 1.0, %v350
      %v352 = vmul.f32 %v349, %v351
      %v353 = vadd.f32 %v349, %v352
      %vm354 = vweird.f32 %v348
      %vm355 = vweird.f32 %v349
      %vm356 = vmor %vm354, %vm355
      %v357 = vsel %vm356, %v349, %v353
      %v358 = vand.u32 2147483647, %v348
      %vm359 = vcmp.eq.f32.partialorder %v358, 8.507059e+37
      %v360 = vand.u32 %v348, 2147483648
      %v361 = vor.u32 1.1754944e-38, %v360
      %v362 = vsel %vm359, %v361, %v357
      %v363 = vmul.f32 1.0, %v362
      %v364 = vld [vmem:[%s2] sm:$0x1]
      %v366 = vperm.slane %v364, 0
      %367 = vrot.lane.b32.xlu0 %v366, 64
      %v368 = vpop.permute.xlu0 %367
      %v370 = vadd.f32 %v339, %v368
      %372 = vrot.lane.b32.xlu0 %v370, 64
      %v373 = vpop.permute.xlu0 %372
      %v375 = vmul.f32 %v363, %v373
      %377 = vrot.lane.b32.xlu0 %v375, 64
      %v378 = vpop.permute.xlu0 %377
      %v380 = vadd.f32 %v343, %v378
      %v381 = vtanh.pop %v380
      %383 = vst [vmem:[#allocation1] ss:$4 sm:$0xff] %v381
      %v384 = vld.sshfl [vmem:[#allocation1] sm:$0xff pattern:$0x73625140]
      %385 = vrot.lane.b32.xlu0 %v384, 64
      %v386 = vpop.permute.xlu0 %385
      %v388 = vsub.f32 %v313, %v386
      %390 = vrot.lane.b32.xlu0 %v388, 32
      %v391 = vpop.permute.xlu0 %390
      %v393 = vmul.f32 %v363, %v391
      %395 = vrot.lane.b32.xlu0 %v393, 32
      %v396 = vpop.permute.xlu0 %395
      %v398 = vadd.f32 %v381, %v396
      %400 = vst [vmem:[#allocation1] ss:$4 sm:$0xff] %v398
      %v401 = vld.sshfl [vmem:[#allocation1] sm:$0xff pattern:$0x73625140]
      %402 = vrot.lane.b32.xlu0 %v401, 64
      %v403 = vpop.permute.xlu0 %402
      %405 = vst.msk [vmem:[#allocation2] sm:$0x3] %vm298, %v403
      %v406 = vpack.c.bf16 %v398, %v398
      %v408 = vrot.slane %v406, 3
      %v411 = vsel %vm303, %v406, %v408
      %413 = vrot.lane.b32.xlu0 %v411, 64
      %v414 = vpop.permute.xlu0 %413
      %s416 = scalar_lea.vmem %s198, 1
      %417 = vst.msk [vmem:[%s416] sm:$0x1] %vm311, %v414
      %v418 = vld [vmem:[#allocation2] sm:$0x3]
      %v419 = vld [vmem:[%s1] sm:$0xff]
      %v420 = vld [vmem:[%s1 + $0x8] sm:$0xff]
      %v421 = vld [vmem:[%s1 + $0x10] sm:$0xff]
      %v422 = vld [vmem:[%s1 + $0x18] sm:$0xff]
      %v424 = vsel %vm211, %v418, 0
      %426 = vmatpush.msra.mxu0 0.0
      %427 = vmatpush.msra.mxu0 0.0
      %428 = vmatpush.msra.mxu0 0.0
      %429 = vmatpush.msra.mxu0 0.0
      %430 = vmatpush.msra.mxu0 0.0
      %431 = vmatpush.msra.mxu0 0.0
      %432 = vmatpush.msra.mxu0 0.0
      %433 = vmatpush.msra.mxu0 0.0
      %434 = vmatpush.msra.mxu0 0.0
      %435 = vmatpush.msra.mxu0 0.0
      %436 = vmatpush.msra.mxu0 0.0
      %437 = vmatpush.msra.mxu0 0.0
      %438 = vmatpush.msra.mxu0 %v422
      %439 = vmatpush.msra.mxu0 %v421
      %440 = vmatpush.msra.mxu0 %v420
      %441 = vmatpush.msra.mxu0 %v419
      %442 = vmatmul.f32.gmra.mxu0 %v424
      %v443 = vpop.f32.mrf.mxu0
      %v444 = vadd.f32 0.0, %v443
      %445 = vdwg.mxu0
      %s446 = scalar_lea.vmem %s190, 2
      %v447 = vld [vmem:[%s446] sm:$0x1]
      %v448 = vunpack.c.l.bf16 %v447
      %v449 = vadd.f32 %v448, %v444
      %v450 = vxor.u32 %v449, 2147483648
      %v451 = vmul.f32 %v450, 1.442695
      %v452 = vpow.pop %v451
      %v453 = vadd.f32 %v452, 1.0
      %v454 = vrcp.pop %v453
      %v455 = vmul.f32 %v453, %v454
      %v456 = vsub.f32 1.0, %v455
      %v457 = vmul.f32 %v454, %v456
      %v458 = vadd.f32 %v454, %v457
      %vm459 = vweird.f32 %v453
      %vm460 = vweird.f32 %v454
      %vm461 = vmor %vm459, %vm460
      %v462 = vsel %vm461, %v454, %v458
      %v463 = vand.u32 2147483647, %v453
      %vm464 = vcmp.eq.f32.partialorder %v463, 8.507059e+37
      %v465 = vand.u32 %v453, 2147483648
      %v466 = vor.u32 1.1754944e-38, %v465
      %v467 = vsel %vm464, %v466, %v462
      %v468 = vmul.f32 1.0, %v467
      %v469 = vld [vmem:[%s2] sm:$0x1]
      %v471 = vperm.slane %v469, 0
      %472 = vrot.lane.b32.xlu0 %v471, 64
      %v473 = vpop.permute.xlu0 %472
      %v475 = vadd.f32 %v444, %v473
      %477 = vrot.lane.b32.xlu0 %v475, 64
      %v478 = vpop.permute.xlu0 %477
      %v480 = vmul.f32 %v468, %v478
      %482 = vrot.lane.b32.xlu0 %v480, 64
      %v483 = vpop.permute.xlu0 %482
      %v485 = vadd.f32 %v448, %v483
      %v486 = vtanh.pop %v485
      %488 = vst [vmem:[#allocation1] ss:$4 sm:$0xff] %v486
      %v489 = vld.sshfl [vmem:[#allocation1] sm:$0xff pattern:$0x73625140]
      %490 = vrot.lane.b32.xlu0 %v489, 64
      %v491 = vpop.permute.xlu0 %490
      %v493 = vsub.f32 %v418, %v491
      %495 = vrot.lane.b32.xlu0 %v493, 32
      %v496 = vpop.permute.xlu0 %495
      %v498 = vmul.f32 %v468, %v496
      %500 = vrot.lane.b32.xlu0 %v498, 32
      %v501 = vpop.permute.xlu0 %500
      %v503 = vadd.f32 %v486, %v501
      %505 = vst [vmem:[#allocation1] ss:$4 sm:$0xff] %v503
      %v506 = vld.sshfl [vmem:[#allocation1] sm:$0xff pattern:$0x73625140]
      %507 = vrot.lane.b32.xlu0 %v506, 64
      %v508 = vpop.permute.xlu0 %507
      %510 = vst.msk [vmem:[#allocation2] sm:$0x3] %vm298, %v508
      %v511 = vpack.c.bf16 %v503, %v503
      %v513 = vrot.slane %v511, 3
      %v516 = vsel %vm303, %v511, %v513
      %518 = vrot.lane.b32.xlu0 %v516, 64
      %v519 = vpop.permute.xlu0 %518
      %s521 = scalar_lea.vmem %s198, 2
      %522 = vst.msk [vmem:[%s521] sm:$0x1] %vm311, %v519
      %v523 = vld [vmem:[#allocation2] sm:$0x3]
      %v524 = vld [vmem:[%s1] sm:$0xff]
      %v525 = vld [vmem:[%s1 + $0x8] sm:$0xff]
      %v526 = vld [vmem:[%s1 + $0x10] sm:$0xff]
      %v527 = vld [vmem:[%s1 + $0x18] sm:$0xff]
      %v529 = vsel %vm211, %v523, 0
      %531 = vmatpush.msra.mxu0 0.0
      %532 = vmatpush.msra.mxu0 0.0
      %533 = vmatpush.msra.mxu0 0.0
      %534 = vmatpush.msra.mxu0 0.0
      %535 = vmatpush.msra.mxu0 0.0
      %536 = vmatpush.msra.mxu0 0.0
      %537 = vmatpush.msra.mxu0 0.0
      %538 = vmatpush.msra.mxu0 0.0
      %539 = vmatpush.msra.mxu0 0.0
      %540 = vmatpush.msra.mxu0 0.0
      %541 = vmatpush.msra.mxu0 0.0
      %542 = vmatpush.msra.mxu0 0.0
      %543 = vmatpush.msra.mxu0 %v527
      %544 = vmatpush.msra.mxu0 %v526
      %545 = vmatpush.msra.mxu0 %v525
      %546 = vmatpush.msra.mxu0 %v524
      %547 = vmatmul.f32.gmra.mxu0 %v529
      %v548 = vpop.f32.mrf.mxu0
      %v549 = vadd.f32 0.0, %v548
      %550 = vdwg.mxu0
      %s551 = scalar_lea.vmem %s190, 3
      %v552 = vld [vmem:[%s551] sm:$0x1]
      %v553 = vunpack.c.l.bf16 %v552
      %v554 = vadd.f32 %v553, %v549
      %v555 = vxor.u32 %v554, 2147483648
      %v556 = vmul.f32 %v555, 1.442695
      %v557 = vpow.pop %v556
      %v558 = vadd.f32 %v557, 1.0
      %v559 = vrcp.pop %v558
      %v560 = vmul.f32 %v558, %v559
      %v561 = vsub.f32 1.0, %v560
      %v562 = vmul.f32 %v559, %v561
      %v563 = vadd.f32 %v559, %v562
      %vm564 = vweird.f32 %v558
      %vm565 = vweird.f32 %v559
      %vm566 = vmor %vm564, %vm565
      %v567 = vsel %vm566, %v559, %v563
      %v568 = vand.u32 2147483647, %v558
      %vm569 = vcmp.eq.f32.partialorder %v568, 8.507059e+37
      %v570 = vand.u32 %v558, 2147483648
      %v571 = vor.u32 1.1754944e-38, %v570
      %v572 = vsel %vm569, %v571, %v567
      %v573 = vmul.f32 1.0, %v572
      %v574 = vld [vmem:[%s2] sm:$0x1]
      %v576 = vperm.slane %v574, 0
      %577 = vrot.lane.b32.xlu0 %v576, 64
      %v578 = vpop.permute.xlu0 %577
      %v580 = vadd.f32 %v549, %v578
      %582 = vrot.lane.b32.xlu0 %v580, 64
      %v583 = vpop.permute.xlu0 %582
      %v585 = vmul.f32 %v573, %v583
      %587 = vrot.lane.b32.xlu0 %v585, 64
      %v588 = vpop.permute.xlu0 %587
      %v590 = vadd.f32 %v553, %v588
      %v591 = vtanh.pop %v590
      %593 = vst [vmem:[#allocation1] ss:$4 sm:$0xff] %v591
      %v594 = vld.sshfl [vmem:[#allocation1] sm:$0xff pattern:$0x73625140]
      %595 = vrot.lane.b32.xlu0 %v594, 64
      %v596 = vpop.permute.xlu0 %595
      %v598 = vsub.f32 %v523, %v596
      %600 = vrot.lane.b32.xlu0 %v598, 32
      %v601 = vpop.permute.xlu0 %600
      %v603 = vmul.f32 %v573, %v601
      %605 = vrot.lane.b32.xlu0 %v603, 32
      %v606 = vpop.permute.xlu0 %605
      %v608 = vadd.f32 %v591, %v606
      %610 = vst [vmem:[#allocation1] ss:$4 sm:$0xff] %v608
      %v611 = vld.sshfl [vmem:[#allocation1] sm:$0xff pattern:$0x73625140]
      %612 = vrot.lane.b32.xlu0 %v611, 64
      %v613 = vpop.permute.xlu0 %612
      %615 = vst.msk [vmem:[#allocation2] sm:$0x3] %vm298, %v613
      %v616 = vpack.c.bf16 %v608, %v608
      %v618 = vrot.slane %v616, 3
      %v621 = vsel %vm303, %v616, %v618
      %623 = vrot.lane.b32.xlu0 %v621, 64
      %v624 = vpop.permute.xlu0 %623
      %s626 = scalar_lea.vmem %s198, 3
      %627 = vst.msk [vmem:[%s626] sm:$0x1] %vm311, %v624
      %s628 = smul.u32 4, %s19
      %p629 = scmp.lt.s32.totalorder %s628, 7
      %s630 = scalar_select %p629, %s628, 7
      %p631 = scmp.lt.s32.totalorder %s18, 0
      %s632 = scalar_select %p631, %s18, 0
      %s633 = sadd.s32 %s632, %s630
      %s634 = scalar_lea.vmem %s3, %s633
      // Predicated region
      $region37: #{vibe_forward.1} parent=31 // pred_check
        %p635 = pneg %p116
      $region38: #{vibe_forward.1} parent=31 // pred_check_branch
        %637 = sbr.rel (%p635) target = $region40
      $region39: #{vibe_forward.1} parent=31 // pred_region
        %s638 = smul.u32 4, %s19
      $region40: #{vibe_forward.1} parent=31 // pred_fallthru
        _
    $region32: #{vibe_forward.1} parent=5 // pred_fallthru
      _
    %p639 = scmp.le.s32.totalorder 2, %s9
    // Predicated region
    $region41: #{vibe_forward.1} parent=5 // pred_check
      %p640 = pneg %p639
    $region42: #{vibe_forward.1} parent=5 // pred_check_branch
      %642 = sbr.rel (%p640) target = $region44
    $region43: #{vibe_forward.1} parent=5 // pred_region
      %s643 = ssub.s32 %s9, 2
      // Predicated region
      $region45: #{vibe_forward.1} parent=43 // pred_check
        %p644 = pneg %p122
      $region46: #{vibe_forward.1} parent=43 // pred_check_branch
        %646 = sbr.rel (%p644) target = $region48
      $region47: #{vibe_forward.1} parent=43 // pred_region
        %s647 = smul.u32 4, %s21
        %p648 = scmp.lt.s32.totalorder %s647, 7
        %s649 = scalar_select %p648, %s647, 7
        %p650 = scmp.lt.s32.totalorder %s20, 0
        %s651 = scalar_select %p650, %s20, 0
        %s652 = sadd.s32 %s651, %s649
        %s653 = scalar_lea.vmem %s3, %s652
      $region48: #{vibe_forward.1} parent=43 // pred_fallthru
        _
    $region44: #{vibe_forward.1} parent=5 // pred_fallthru
      _
  $region6: #{vibe_forward.1} parent=0 // loop_footer
    %s13 = sadd.s32 1, %s9
  $region7: #{vibe_forward.1} parent=0 // loop_footer_branch
    %8 = sbr.rel target = $region3
  $region8: #{vibe_forward.1} parent=0 // loop_exit
    _

</llo_original>
